<compile_context>
chip_gen: v7x
topology: tpu7x:2x2x1
jax: 0.10.0
libtpu: 0.0.40
codegen_flags: <defaults>
</compile_context>

<pallas_src>
import jax
import jax.numpy as jnp
from jax.experimental import pallas as pl
from jax.experimental.pallas import tpu as pltpu

INPUT_SIZE = 4
OUTPUT_SIZE = 3

# Lane packing: PACK logical rows share one packed row.  PACK = 128 is the
# smallest packing for which PACK*OUTPUT_SIZE is a multiple of 128, giving a
# lane-dense output slab (no masked stores).
PACK = 128
LANES_IN = PACK * INPUT_SIZE     # 512  input lanes per packed row
LANES_OUT = PACK * OUTPUT_SIZE   # 384  output lanes per packed row

# Packed rows per grid step.  512 packed rows = 65536 logical rows:
#   input tile  512*512*4 B = 1.0 MiB,  output tile 512*384*4 B = 0.75 MiB,
#   packed weight 512*384*4 B = 0.75 MiB (resident; index_map constant).
# With double buffering this stays ~4 MiB -> comfortably inside the scoped
# VMEM default on v5e/v6e (and on v7x's 64 MiB physical VMEM), while each DMA
# still moves ~1 MiB so the ~0.35 us per-step overhead is amortized.
MAX_TILE_PACKED = 512


def _round_up(x, m):
    return ((x + m - 1) // m) * m


def _linear_kernel(x_ref, w_ref, b_ref, o_ref):
    # x: (TM, 512)  w: (512, 384)  b: (1, 384)  ->  o: (TM, 384)
    o_ref[...] = (
        jnp.dot(x_ref[...], w_ref[...], preferred_element_type=jnp.float32)
        + b_ref[...]
    ).astype(o_ref.dtype)


def ann_linear_forward(x, weight, bias):
    """y_hat = x @ weight.T + bias (PyTorch nn.Linear(4, 3) forward)."""
    batch = x.shape[0]

    # --- layout plumbing (outside the kernel, all tiny / free views) --------
    # Block-diagonal weight: 128 copies of W.T (4x3) on the diagonal -> (512, 384).
    w_block = jnp.kron(jnp.eye(PACK, dtype=weight.dtype), weight.T)
    b_block = jnp.tile(bias, PACK).reshape(1, LANES_OUT)            # (1, 384)

    rows_packed = pl.cdiv(batch, PACK)                 # packed rows needed
    tile_packed = min(MAX_TILE_PACKED, _round_up(rows_packed, 8))
    rows_padded = _round_up(rows_packed, tile_packed)  # grid divides evenly
    batch_padded = rows_padded * PACK

    x_pad = jnp.pad(x, ((0, batch_padded - batch), (0, 0)))
    x_packed = x_pad.reshape(rows_padded, LANES_IN)    # free row-major view

    grid = (rows_padded // tile_packed,)

    out_packed = pl.pallas_call(
        _linear_kernel,
        out_shape=jax.ShapeDtypeStruct((rows_padded, LANES_OUT), jnp.float32),
        grid=grid,
        in_specs=[
            pl.BlockSpec((tile_packed, LANES_IN), lambda i: (i, 0)),   # x tile
            pl.BlockSpec((LANES_IN, LANES_OUT), lambda i: (0, 0)),     # weight (resident)
            pl.BlockSpec((1, LANES_OUT), lambda i: (0, 0)),            # bias   (resident)
        ],
        out_specs=pl.BlockSpec((tile_packed, LANES_OUT), lambda i: (i, 0)),
        compiler_params=pltpu.CompilerParams(
            dimension_semantics=("parallel",),
        ),
        cost_estimate=pl.CostEstimate(
            flops=2 * rows_padded * LANES_IN * LANES_OUT,
            transcendentals=0,
            bytes_accessed=4
            * (
                rows_padded * LANES_IN         # x read
                + rows_padded * LANES_OUT      # y write
                + LANES_IN * LANES_OUT         # packed weight
                + LANES_OUT                    # packed bias
            ),
        ),
    )(x_packed, w_block, b_block)

    # Un-pack: (rows_padded, 384) -> (batch_padded, 3) -> (batch, 3) (view + slice).
    return out_packed.reshape(batch_padded, OUTPUT_SIZE)[:batch]


def init_params(key):
    """Deterministic init mirroring nn.Linear's default U(-1/sqrt(fan_in), +)."""
    k_w, k_b = jax.random.split(key)
    bound = 1.0 / (INPUT_SIZE ** 0.5)
    weight = jax.random.uniform(
        k_w, (OUTPUT_SIZE, INPUT_SIZE), jnp.float32, minval=-bound, maxval=bound
    )
    bias = jax.random.uniform(
        k_b, (OUTPUT_SIZE,), jnp.float32, minval=-bound, maxval=bound
    )
    return weight, bias


if __name__ == "__main__":
    key = jax.random.PRNGKey(0)
    k_x, k_p = jax.random.split(key)

    batch = 64
    x = jax.random.normal(k_x, (batch, INPUT_SIZE), jnp.float32)
    weight, bias = init_params(k_p)

    y = jax.jit(ann_linear_forward)(x, weight, bias)
    jax.block_until_ready(y)

    # Sanity check against plain JAX reference.
    y_ref = x @ weight.T + bias
    assert y.shape == (batch, OUTPUT_SIZE)
    assert jnp.allclose(y, y_ref, atol=1e-5, rtol=1e-5)

    print("KERNEL_OK")
</pallas_src>

<mosaic_0001>
module attributes {stable_mosaic.version = 11 : i64} {
  func.func @_linear_kernel(%arg0: i32, %arg1: memref<8x512xf32, #tpu.memory_space<vmem>>, %arg2: memref<512x384xf32, #tpu.memory_space<vmem>>, %arg3: memref<1x384xf32, #tpu.memory_space<vmem>>, %arg4: memref<8x384xf32, #tpu.memory_space<vmem>>) attributes {dimension_semantics = [#tpu.dimension_semantics<parallel>], iteration_bounds = array<i64: 1>, scalar_prefetch = 0 : i64, scratch_operands = 0 : i64, tpu.core_type = #tpu.core_type<tc>, window_params = [{transform_indices = @transform_0, window_bounds = array<i64: 8, 512>}, {pipeline_mode = #tpu.pipeline_mode<synchronous>, transform_indices = @transform_1, window_bounds = array<i64: 512, 384>}, {pipeline_mode = #tpu.pipeline_mode<synchronous>, transform_indices = @transform_2, window_bounds = array<i64: 1, 384>}, {transform_indices = @transform_3, window_bounds = array<i64: 8, 384>}]} {
    %c0 = arith.constant 0 : index
    %c0_0 = arith.constant 0 : index
    %0 = vector.load %arg1[%c0, %c0_0] : memref<8x512xf32, #tpu.memory_space<vmem>>, vector<8x512xf32>
    %c0_1 = arith.constant 0 : index
    %c0_2 = arith.constant 0 : index
    %1 = vector.load %arg2[%c0_1, %c0_2] : memref<512x384xf32, #tpu.memory_space<vmem>>, vector<512x384xf32>
    %cst = arith.constant dense<0.000000e+00> : vector<8x384xf32>
    %2 = tpu.matmul %0, %1, %cst {dimension_numbers = #tpu.dot_dimension_numbers<[1], [0], [0], [1], [0, 0, 1, 1], [], []>} : vector<8x512xf32>, vector<512x384xf32>, vector<8x384xf32> -> vector<8x384xf32>
    %c0_3 = arith.constant 0 : index
    %c0_4 = arith.constant 0 : index
    %3 = vector.load %arg3[%c0_3, %c0_4] : memref<1x384xf32, #tpu.memory_space<vmem>>, vector<1x384xf32>
    %4 = vector.broadcast %3 : vector<1x384xf32> to vector<8x384xf32>
    %5 = arith.addf %2, %4 : vector<8x384xf32>
    %c0_5 = arith.constant 0 : index
    %c0_6 = arith.constant 0 : index
    %6 = vector.load %arg4[%c0_5, %c0_6] : memref<8x384xf32, #tpu.memory_space<vmem>>, vector<8x384xf32>
    tpu.vector_store %arg4[%c0_5, %c0_6], %5 {strides = array<i32>} : memref<8x384xf32, #tpu.memory_space<vmem>>, vector<8x384xf32>,
    return
  }
  func.func @transform_0(%arg0: i32) -> (i32, i32) {
    %c0_i32 = arith.constant 0 : i32
    %c0_i32_0 = arith.constant 0 : i32
    return %arg0, %c0_i32 : i32, i32
  }
  func.func @transform_1(%arg0: i32) -> (i32, i32) {
    %c0_i32 = arith.constant 0 : i32
    %c0_i32_0 = arith.constant 0 : i32
    %c0_i32_1 = arith.constant 0 : i32
    return %c0_i32, %c0_i32_0 : i32, i32
  }
  func.func @transform_2(%arg0: i32) -> (i32, i32) {
    %c0_i32 = arith.constant 0 : i32
    %c0_i32_0 = arith.constant 0 : i32
    %c0_i32_1 = arith.constant 0 : i32
    return %c0_i32, %c0_i32_0 : i32, i32
  }
  func.func @transform_3(%arg0: i32) -> (i32, i32) {
    %c0_i32 = arith.constant 0 : i32
    %c0_i32_0 = arith.constant 0 : i32
    return %arg0, %c0_i32 : i32, i32
  }
}

</mosaic_0001>

<llo_original>
// kernel: tile.8
$region0: #{tile.8}
  #allocation0 [shape = 's32[1]{0}', space=sflag, size = 0x4, scoped, tag = 'scoped memory for tile.8']
  %s0 = inlined_call_operand.vmem [shape: f32[3], index: 0, kind: input, shape index: {}]
  %s1 = inlined_call_operand.vmem [shape: f32[128,3], index: 1, kind: output, shape index: {}]
  // Predicated region
  $region2: #{tile.8} parent=0 // pred_check
    _
  $region3: #{tile.8} parent=0 // pred_check_branch
    %3 = sbr.rel (0) target = $region5
  $region4: #{tile.8} parent=0 // pred_region
    _
  $region5: #{tile.8} parent=0 // pred_fallthru
    _
  %v4 = vld [vmem:[%s0] ss:$0 sm:$0xff]
  %5 = vst [vmem:[%s1] sm:$0xff] %v4
  %s6 = scalar_lea.vmem %s1, 8
  %7 = vst [vmem:[%s6] sm:$0xff] %v4
  %s8 = scalar_lea.vmem %s1, 16
  %9 = vst [vmem:[%s8] sm:$0xff] %v4
  %s10 = scalar_lea.vmem %s1, 24
  %11 = vst [vmem:[%s10] sm:$0xff] %v4
  %s12 = scalar_lea.vmem %s1, 32
  %13 = vst [vmem:[%s12] sm:$0xff] %v4
  %s14 = scalar_lea.vmem %s1, 40
  %15 = vst [vmem:[%s14] sm:$0xff] %v4
  %s16 = scalar_lea.vmem %s1, 48
  %17 = vst [vmem:[%s16] sm:$0xff] %v4
  %s18 = scalar_lea.vmem %s1, 56
  %19 = vst [vmem:[%s18] sm:$0xff] %v4
  %s20 = scalar_lea.vmem %s1, 64
  %21 = vst [vmem:[%s20] sm:$0xff] %v4
  %s22 = scalar_lea.vmem %s1, 72
  %23 = vst [vmem:[%s22] sm:$0xff] %v4
  %s24 = scalar_lea.vmem %s1, 80
  %25 = vst [vmem:[%s24] sm:$0xff] %v4
  %s26 = scalar_lea.vmem %s1, 88
  %27 = vst [vmem:[%s26] sm:$0xff] %v4
  %s28 = scalar_lea.vmem %s1, 96
  %29 = vst [vmem:[%s28] sm:$0xff] %v4
  %s30 = scalar_lea.vmem %s1, 104
  %31 = vst [vmem:[%s30] sm:$0xff] %v4
  %s32 = scalar_lea.vmem %s1, 112
  %33 = vst [vmem:[%s32] sm:$0xff] %v4
  %s34 = scalar_lea.vmem %s1, 120
  %35 = vst [vmem:[%s34] sm:$0xff] %v4

// kernel: tile.9
$region0: #{tile.9}
  %s0 = inlined_call_operand.vmem [shape: f32[128,3], index: 0, kind: input, shape index: {}]
  %s1 = inlined_call_operand.vmem [shape: f32[1,384], index: 1, kind: output, shape index: {}]
  $region1: #{tile.9} parent=0
    #allocation0 [shape = 'u8[12288]{0}', space=vmem, size = 0x3000, scoped, tag = 'scoped mem for output reshape']
    %v2 = vld [vmem:[%s0] sm:$0x1]
    %vm3 = vcmask 23552
    %4 = vst.msk [vmem:[#allocation0] sm:$0x1] %vm3, %v2
    %s5 = scalar_lea.vmem %s0, 85
    %v6 = vld [vmem:[%s5] sm:$0x1]
    %s7 = scalar_lea.vmem %s0, 85
    %v8 = vld [vmem:[%s7] sm:$0x1]
    %vm9 = vcmask 7168
    %v10 = vsel %vm9, %v8, %v6
    %11 = vrot.lane.b32.xlu0 %v10, 127
    %v12 = vpop.permute.xlu0 %11
    %vm13 = vcmask 15360
    %s14 = scalar_lea.vmem [#allocation0], 16
    %15 = vst.msk [vmem:[%s14] sm:$0x1] %vm13, %v12
    %vm16 = vcmask 1048568
    %s17 = scalar_lea.vmem [#allocation0], 8
    %18 = vst.msk [vmem:[%s17] sm:$0x1] %vm16, %v12
    %s19 = scalar_lea.vmem %s0, 42
    %v20 = vld [vmem:[%s19] sm:$0x1]
    %s21 = scalar_lea.vmem %s0, 42
    %v22 = vld [vmem:[%s21] sm:$0x1]
    %vm23 = vcmask 15360
    %v24 = vsel %vm23, %v22, %v20
    %25 = vrot.lane.b32.xlu0 %v24, 126
    %v26 = vpop.permute.xlu0 %25
    %vm27 = vcmask 7168
    %s28 = scalar_lea.vmem [#allocation0], 8
    %29 = vst.msk [vmem:[%s28] sm:$0x1] %vm27, %v26
    %vm30 = vcmask 1048560
    %31 = vst.msk [vmem:[#allocation0] sm:$0x1] %vm30, %v26
    %s32 = scalar_lea.vmem %s0, 127
    %v33 = vld [vmem:[%s32] sm:$0x1]
    %34 = vrot.lane.b32.xlu0 %v33, 125
    %v35 = vpop.permute.xlu0 %34
    %vm36 = vcmask 1048552
    %s37 = scalar_lea.vmem [#allocation0], 16
    %38 = vst.msk [vmem:[%s37] sm:$0x1] %vm36, %v35
    %s39 = scalar_lea.vmem %s0, 84
    %v40 = vld [vmem:[%s39] sm:$0x1]
    %41 = vrot.lane.b32.xlu0 %v40, 124
    %v42 = vpop.permute.xlu0 %41
    %vm43 = vcmask 1040352
    %s44 = scalar_lea.vmem [#allocation0], 8
    %45 = vst.msk [vmem:[%s44] sm:$0x1] %vm43, %v42
    %s46 = scalar_lea.vmem %s0, 41
    %v47 = vld [vmem:[%s46] sm:$0x1]
    %48 = vrot.lane.b32.xlu0 %v47, 123
    %v49 = vpop.permute.xlu0 %48
    %vm50 = vcmask 1032152
    %51 = vst.msk [vmem:[#allocation0] sm:$0x1] %vm50, %v49
    %s52 = scalar_lea.vmem %s0, 126
    %v53 = vld [vmem:[%s52] sm:$0x1]
    %54 = vrot.lane.b32.xlu0 %v53, 122
    %v55 = vpop.permute.xlu0 %54
    %vm56 = vcmask 1023952
    %s57 = scalar_lea.vmem [#allocation0], 16
    %58 = vst.msk [vmem:[%s57] sm:$0x1] %vm56, %v55
    %s59 = scalar_lea.vmem %s0, 83
    %v60 = vld [vmem:[%s59] sm:$0x1]
    %61 = vrot.lane.b32.xlu0 %v60, 121
    %v62 = vpop.permute.xlu0 %61
    %vm63 = vcmask 1015752
    %s64 = scalar_lea.vmem [#allocation0], 8
    %65 = vst.msk [vmem:[%s64] sm:$0x1] %vm63, %v62
    %s66 = scalar_lea.vmem %s0, 40
    %v67 = vld [vmem:[%s66] sm:$0x1]
    %68 = vrot.lane.b32.xlu0 %v67, 120
    %v69 = vpop.permute.xlu0 %68
    %vm70 = vcmask 1007552
    %71 = vst.msk [vmem:[#allocation0] sm:$0x1] %vm70, %v69
    %s72 = scalar_lea.vmem %s0, 125
    %v73 = vld [vmem:[%s72] sm:$0x1]
    %74 = vrot.lane.b32.xlu0 %v73, 119
    %v75 = vpop.permute.xlu0 %74
    %vm76 = vcmask 999352
    %s77 = scalar_lea.vmem [#allocation0], 16
    %78 = vst.msk [vmem:[%s77] sm:$0x1] %vm76, %v75
    %s79 = scalar_lea.vmem %s0, 82
    %v80 = vld [vmem:[%s79] sm:$0x1]
    %81 = vrot.lane.b32.xlu0 %v80, 118
    %v82 = vpop.permute.xlu0 %81
    %vm83 = vcmask 991152
    %s84 = scalar_lea.vmem [#allocation0], 8
    %85 = vst.msk [vmem:[%s84] sm:$0x1] %vm83, %v82
    %s86 = scalar_lea.vmem %s0, 39
    %v87 = vld [vmem:[%s86] sm:$0x1]
    %88 = vrot.lane.b32.xlu0 %v87, 117
    %v89 = vpop.permute.xlu0 %88
    %vm90 = vcmask 982952
    %91 = vst.msk [vmem:[#allocation0] sm:$0x1] %vm90, %v89
    %s92 = scalar_lea.vmem %s0, 124
    %v93 = vld [vmem:[%s92] sm:$0x1]
    %94 = vrot.lane.b32.xlu0 %v93, 116
    %v95 = vpop.permute.xlu0 %94
    %vm96 = vcmask 974752
    %s97 = scalar_lea.vmem [#allocation0], 16
    %98 = vst.msk [vmem:[%s97] sm:$0x1] %vm96, %v95
    %s99 = scalar_lea.vmem %s0, 81
    %v100 = vld [vmem:[%s99] sm:$0x1]
    %101 = vrot.lane.b32.xlu0 %v100, 115
    %v102 = vpop.permute.xlu0 %101
    %vm103 = vcmask 966552
    %s104 = scalar_lea.vmem [#allocation0], 8
    %105 = vst.msk [vmem:[%s104] sm:$0x1] %vm103, %v102
    %s106 = scalar_lea.vmem %s0, 38
    %v107 = vld [vmem:[%s106] sm:$0x1]
    %108 = vrot.lane.b32.xlu0 %v107, 114
    %v109 = vpop.permute.xlu0 %108
    %vm110 = vcmask 958352
    %111 = vst.msk [vmem:[#allocation0] sm:$0x1] %vm110, %v109
    %s112 = scalar_lea.vmem %s0, 123
    %v113 = vld [vmem:[%s112] sm:$0x1]
    %114 = vrot.lane.b32.xlu0 %v113, 113
    %v115 = vpop.permute.xlu0 %114
    %vm116 = vcmask 950152
    %s117 = scalar_lea.vmem [#allocation0], 16
    %118 = vst.msk [vmem:[%s117] sm:$0x1] %vm116, %v115
    %s119 = scalar_lea.vmem %s0, 80
    %v120 = vld [vmem:[%s119] sm:$0x1]
    %121 = vrot.lane.b32.xlu0 %v120, 112
    %v122 = vpop.permute.xlu0 %121
    %vm123 = vcmask 941952
    %s124 = scalar_lea.vmem [#allocation0], 8
    %125 = vst.msk [vmem:[%s124] sm:$0x1] %vm123, %v122
    %s126 = scalar_lea.vmem %s0, 37
    %v127 = vld [vmem:[%s126] sm:$0x1]
    %128 = vrot.lane.b32.xlu0 %v127, 111
    %v129 = vpop.permute.xlu0 %128
    %vm130 = vcmask 933752
    %131 = vst.msk [vmem:[#allocation0] sm:$0x1] %vm130, %v129
    %s132 = scalar_lea.vmem %s0, 122
    %v133 = vld [vmem:[%s132] sm:$0x1]
    %134 = vrot.lane.b32.xlu0 %v133, 110
    %v135 = vpop.permute.xlu0 %134
    %vm136 = vcmask 925552
    %s137 = scalar_lea.vmem [#allocation0], 16
    %138 = vst.msk [vmem:[%s137] sm:$0x1] %vm136, %v135
    %s139 = scalar_lea.vmem %s0, 79
    %v140 = vld [vmem:[%s139] sm:$0x1]
    %141 = vrot.lane.b32.xlu0 %v140, 109
    %v142 = vpop.permute.xlu0 %141
    %vm143 = vcmask 917352
    %s144 = scalar_lea.vmem [#allocation0], 8
    %145 = vst.msk [vmem:[%s144] sm:$0x1] %vm143, %v142
    %s146 = scalar_lea.vmem %s0, 36
    %v147 = vld [vmem:[%s146] sm:$0x1]
    %148 = vrot.lane.b32.xlu0 %v147, 108
    %v149 = vpop.permute.xlu0 %148
    %vm150 = vcmask 909152
    %151 = vst.msk [vmem:[#allocation0] sm:$0x1] %vm150, %v149
    %s152 = scalar_lea.vmem %s0, 121
    %v153 = vld [vmem:[%s152] sm:$0x1]
    %154 = vrot.lane.b32.xlu0 %v153, 107
    %v155 = vpop.permute.xlu0 %154
    %vm156 = vcmask 900952
    %s157 = scalar_lea.vmem [#allocation0], 16
    %158 = vst.msk [vmem:[%s157] sm:$0x1] %vm156, %v155
    %s159 = scalar_lea.vmem %s0, 78
    %v160 = vld [vmem:[%s159] sm:$0x1]
    %161 = vrot.lane.b32.xlu0 %v160, 106
    %v162 = vpop.permute.xlu0 %161
    %vm163 = vcmask 892752
    %s164 = scalar_lea.vmem [#allocation0], 8
    %165 = vst.msk [vmem:[%s164] sm:$0x1] %vm163, %v162
    %s166 = scalar_lea.vmem %s0, 35
    %v167 = vld [vmem:[%s166] sm:$0x1]
    %168 = vrot.lane.b32.xlu0 %v167, 105
    %v169 = vpop.permute.xlu0 %168
    %vm170 = vcmask 884552
    %171 = vst.msk [vmem:[#allocation0] sm:$0x1] %vm170, %v169
    %s172 = scalar_lea.vmem %s0, 120
    %v173 = vld [vmem:[%s172] sm:$0x1]
    %174 = vrot.lane.b32.xlu0 %v173, 104
    %v175 = vpop.permute.xlu0 %174
    %vm176 = vcmask 876352
    %s177 = scalar_lea.vmem [#allocation0], 16
    %178 = vst.msk [vmem:[%s177] sm:$0x1] %vm176, %v175
    %s179 = scalar_lea.vmem %s0, 77
    %v180 = vld [vmem:[%s179] sm:$0x1]
    %181 = vrot.lane.b32.xlu0 %v180, 103
    %v182 = vpop.permute.xlu0 %181
    %vm183 = vcmask 868152
    %s184 = scalar_lea.vmem [#allocation0], 8
    %185 = vst.msk [vmem:[%s184] sm:$0x1] %vm183, %v182
    %s186 = scalar_lea.vmem %s0, 34
    %v187 = vld [vmem:[%s186] sm:$0x1]
    %188 = vrot.lane.b32.xlu0 %v187, 102
    %v189 = vpop.permute.xlu0 %188
    %vm190 = vcmask 859952
    %191 = vst.msk [vmem:[#allocation0] sm:$0x1] %vm190, %v189
    %s192 = scalar_lea.vmem %s0, 119
    %v193 = vld [vmem:[%s192] sm:$0x1]
    %194 = vrot.lane.b32.xlu0 %v193, 101
    %v195 = vpop.permute.xlu0 %194
    %vm196 = vcmask 851752
    %s197 = scalar_lea.vmem [#allocation0], 16
    %198 = vst.msk [vmem:[%s197] sm:$0x1] %vm196, %v195
    %s199 = scalar_lea.vmem %s0, 76
    %v200 = vld [vmem:[%s199] sm:$0x1]
    %201 = vrot.lane.b32.xlu0 %v200, 100
    %v202 = vpop.permute.xlu0 %201
    %vm203 = vcmask 843552
    %s204 = scalar_lea.vmem [#allocation0], 8
    %205 = vst.msk [vmem:[%s204] sm:$0x1] %vm203, %v202
    %s206 = scalar_lea.vmem %s0, 33
    %v207 = vld [vmem:[%s206] sm:$0x1]
    %208 = vrot.lane.b32.xlu0 %v207, 99
    %v209 = vpop.permute.xlu0 %208
    %vm210 = vcmask 835352
    %211 = vst.msk [vmem:[#allocation0] sm:$0x1] %vm210, %v209
    %s212 = scalar_lea.vmem %s0, 118
    %v213 = vld [vmem:[%s212] sm:$0x1]
    %214 = vrot.lane.b32.xlu0 %v213, 98
    %v215 = vpop.permute.xlu0 %214
    %vm216 = vcmask 827152
    %s217 = scalar_lea.vmem [#allocation0], 16
    %218 = vst.msk [vmem:[%s217] sm:$0x1] %vm216, %v215
    %s219 = scalar_lea.vmem %s0, 75
    %v220 = vld [vmem:[%s219] sm:$0x1]
    %221 = vrot.lane.b32.xlu0 %v220, 97
    %v222 = vpop.permute.xlu0 %221
    %vm223 = vcmask 818952
    %s224 = scalar_lea.vmem [#allocation0], 8
    %225 = vst.msk [vmem:[%s224] sm:$0x1] %vm223, %v222
    %s226 = scalar_lea.vmem %s0, 32
    %v227 = vld [vmem:[%s226] sm:$0x1]
    %228 = vrot.lane.b32.xlu0 %v227, 96
    %v229 = vpop.permute.xlu0 %228
    %vm230 = vcmask 810752
    %231 = vst.msk [vmem:[#allocation0] sm:$0x1] %vm230, %v229
    %s232 = scalar_lea.vmem %s0, 117
    %v233 = vld [vmem:[%s232] sm:$0x1]
    %234 = vrot.lane.b32.xlu0 %v233, 95
    %v235 = vpop.permute.xlu0 %234
    %vm236 = vcmask 802552
    %s237 = scalar_lea.vmem [#allocation0], 16
    %238 = vst.msk [vmem:[%s237] sm:$0x1] %vm236, %v235
    %s239 = scalar_lea.vmem %s0, 74
    %v240 = vld [vmem:[%s239] sm:$0x1]
    %241 = vrot.lane.b32.xlu0 %v240, 94
    %v242 = vpop.permute.xlu0 %241
    %vm243 = vcmask 794352
    %s244 = scalar_lea.vmem [#allocation0], 8
    %245 = vst.msk [vmem:[%s244] sm:$0x1] %vm243, %v242
    %s246 = scalar_lea.vmem %s0, 31
    %v247 = vld [vmem:[%s246] sm:$0x1]
    %248 = vrot.lane.b32.xlu0 %v247, 93
    %v249 = vpop.permute.xlu0 %248
    %vm250 = vcmask 786152
    %251 = vst.msk [vmem:[#allocation0] sm:$0x1] %vm250, %v249
    %s252 = scalar_lea.vmem %s0, 116
    %v253 = vld [vmem:[%s252] sm:$0x1]
    %254 = vrot.lane.b32.xlu0 %v253, 92
    %v255 = vpop.permute.xlu0 %254
    %vm256 = vcmask 777952
    %s257 = scalar_lea.vmem [#allocation0], 16
    %258 = vst.msk [vmem:[%s257] sm:$0x1] %vm256, %v255
    %s259 = scalar_lea.vmem %s0, 73
    %v260 = vld [vmem:[%s259] sm:$0x1]
    %261 = vrot.lane.b32.xlu0 %v260, 91
    %v262 = vpop.permute.xlu0 %261
    %vm263 = vcmask 769752
    %s264 = scalar_lea.vmem [#allocation0], 8
    %265 = vst.msk [vmem:[%s264] sm:$0x1] %vm263, %v262
    %s266 = scalar_lea.vmem %s0, 30
    %v267 = vld [vmem:[%s266] sm:$0x1]
    %268 = vrot.lane.b32.xlu0 %v267, 90
    %v269 = vpop.permute.xlu0 %268
    %vm270 = vcmask 761552
    %271 = vst.msk [vmem:[#allocation0] sm:$0x1] %vm270, %v269
    %s272 = scalar_lea.vmem %s0, 115
    %v273 = vld [vmem:[%s272] sm:$0x1]
    %274 = vrot.lane.b32.xlu0 %v273, 89
    %v275 = vpop.permute.xlu0 %274
    %vm276 = vcmask 753352
    %s277 = scalar_lea.vmem [#allocation0], 16
    %278 = vst.msk [vmem:[%s277] sm:$0x1] %vm276, %v275
    %s279 = scalar_lea.vmem %s0, 72
    %v280 = vld [vmem:[%s279] sm:$0x1]
    %281 = vrot.lane.b32.xlu0 %v280, 88
    %v282 = vpop.permute.xlu0 %281
    %vm283 = vcmask 745152
    %s284 = scalar_lea.vmem [#allocation0], 8
    %285 = vst.msk [vmem:[%s284] sm:$0x1] %vm283, %v282
    %s286 = scalar_lea.vmem %s0, 29
    %v287 = vld [vmem:[%s286] sm:$0x1]
    %288 = vrot.lane.b32.xlu0 %v287, 87
    %v289 = vpop.permute.xlu0 %288
    %vm290 = vcmask 736952
    %291 = vst.msk [vmem:[#allocation0] sm:$0x1] %vm290, %v289
    %s292 = scalar_lea.vmem %s0, 114
    %v293 = vld [vmem:[%s292] sm:$0x1]
    %294 = vrot.lane.b32.xlu0 %v293, 86
    %v295 = vpop.permute.xlu0 %294
    %vm296 = vcmask 728752
    %s297 = scalar_lea.vmem [#allocation0], 16
    %298 = vst.msk [vmem:[%s297] sm:$0x1] %vm296, %v295
    %s299 = scalar_lea.vmem %s0, 71
    %v300 = vld [vmem:[%s299] sm:$0x1]
    %301 = vrot.lane.b32.xlu0 %v300, 85
    %v302 = vpop.permute.xlu0 %301
    %vm303 = vcmask 720552
    %s304 = scalar_lea.vmem [#allocation0], 8
    %305 = vst.msk [vmem:[%s304] sm:$0x1] %vm303, %v302
    %s306 = scalar_lea.vmem %s0, 28
    %v307 = vld [vmem:[%s306] sm:$0x1]
    %308 = vrot.lane.b32.xlu0 %v307, 84
    %v309 = vpop.permute.xlu0 %308
    %vm310 = vcmask 712352
    %311 = vst.msk [vmem:[#allocation0] sm:$0x1] %vm310, %v309
    %s312 = scalar_lea.vmem %s0, 113
    %v313 = vld [vmem:[%s312] sm:$0x1]
    %314 = vrot.lane.b32.xlu0 %v313, 83
    %v315 = vpop.permute.xlu0 %314
    %vm316 = vcmask 704152
    %s317 = scalar_lea.vmem [#allocation0], 16
    %318 = vst.msk [vmem:[%s317] sm:$0x1] %vm316, %v315
    %s319 = scalar_lea.vmem %s0, 70
    %v320 = vld [vmem:[%s319] sm:$0x1]
    %321 = vrot.lane.b32.xlu0 %v320, 82
    %v322 = vpop.permute.xlu0 %321
    %vm323 = vcmask 695952
    %s324 = scalar_lea.vmem [#allocation0], 8
    %325 = vst.msk [vmem:[%s324] sm:$0x1] %vm323, %v322
    %s326 = scalar_lea.vmem %s0, 27
    %v327 = vld [vmem:[%s326] sm:$0x1]
    %328 = vrot.lane.b32.xlu0 %v327, 81
    %v329 = vpop.permute.xlu0 %328
    %vm330 = vcmask 687752
    %331 = vst.msk [vmem:[#allocation0] sm:$0x1] %vm330, %v329
    %s332 = scalar_lea.vmem %s0, 112
    %v333 = vld [vmem:[%s332] sm:$0x1]
    %334 = vrot.lane.b32.xlu0 %v333, 80
    %v335 = vpop.permute.xlu0 %334
    %vm336 = vcmask 679552
    %s337 = scalar_lea.vmem [#allocation0], 16
    %338 = vst.msk [vmem:[%s337] sm:$0x1] %vm336, %v335
    %s339 = scalar_lea.vmem %s0, 69
    %v340 = vld [vmem:[%s339] sm:$0x1]
    %341 = vrot.lane.b32.xlu0 %v340, 79
    %v342 = vpop.permute.xlu0 %341
    %vm343 = vcmask 671352
    %s344 = scalar_lea.vmem [#allocation0], 8
    %345 = vst.msk [vmem:[%s344] sm:$0x1] %vm343, %v342
    %s346 = scalar_lea.vmem %s0, 26
    %v347 = vld [vmem:[%s346] sm:$0x1]
    %348 = vrot.lane.b32.xlu0 %v347, 78
    %v349 = vpop.permute.xlu0 %348
    %vm350 = vcmask 663152
    %351 = vst.msk [vmem:[#allocation0] sm:$0x1] %vm350, %v349
    %s352 = scalar_lea.vmem %s0, 111
    %v353 = vld [vmem:[%s352] sm:$0x1]
    %354 = vrot.lane.b32.xlu0 %v353, 77
    %v355 = vpop.permute.xlu0 %354
    %vm356 = vcmask 654952
    %s357 = scalar_lea.vmem [#allocation0], 16
    %358 = vst.msk [vmem:[%s357] sm:$0x1] %vm356, %v355
    %s359 = scalar_lea.vmem %s0, 68
    %v360 = vld [vmem:[%s359] sm:$0x1]
    %361 = vrot.lane.b32.xlu0 %v360, 76
    %v362 = vpop.permute.xlu0 %361
    %vm363 = vcmask 646752
    %s364 = scalar_lea.vmem [#allocation0], 8
    %365 = vst.msk [vmem:[%s364] sm:$0x1] %vm363, %v362
    %s366 = scalar_lea.vmem %s0, 25
    %v367 = vld [vmem:[%s366] sm:$0x1]
    %368 = vrot.lane.b32.xlu0 %v367, 75
    %v369 = vpop.permute.xlu0 %368
    %vm370 = vcmask 638552
    %371 = vst.msk [vmem:[#allocation0] sm:$0x1] %vm370, %v369
    %s372 = scalar_lea.vmem %s0, 110
    %v373 = vld [vmem:[%s372] sm:$0x1]
    %374 = vrot.lane.b32.xlu0 %v373, 74
    %v375 = vpop.permute.xlu0 %374
    %vm376 = vcmask 630352
    %s377 = scalar_lea.vmem [#allocation0], 16
    %378 = vst.msk [vmem:[%s377] sm:$0x1] %vm376, %v375
    %s379 = scalar_lea.vmem %s0, 67
    %v380 = vld [vmem:[%s379] sm:$0x1]
    %381 = vrot.lane.b32.xlu0 %v380, 73
    %v382 = vpop.permute.xlu0 %381
    %vm383 = vcmask 622152
    %s384 = scalar_lea.vmem [#allocation0], 8
    %385 = vst.msk [vmem:[%s384] sm:$0x1] %vm383, %v382
    %s386 = scalar_lea.vmem %s0, 24
    %v387 = vld [vmem:[%s386] sm:$0x1]
    %388 = vrot.lane.b32.xlu0 %v387, 72
    %v389 = vpop.permute.xlu0 %388
    %vm390 = vcmask 613952
    %391 = vst.msk [vmem:[#allocation0] sm:$0x1] %vm390, %v389
    %s392 = scalar_lea.vmem %s0, 109
    %v393 = vld [vmem:[%s392] sm:$0x1]
    %394 = vrot.lane.b32.xlu0 %v393, 71
    %v395 = vpop.permute.xlu0 %394
    %vm396 = vcmask 605752
    %s397 = scalar_lea.vmem [#allocation0], 16
    %398 = vst.msk [vmem:[%s397] sm:$0x1] %vm396, %v395
    %s399 = scalar_lea.vmem %s0, 66
    %v400 = vld [vmem:[%s399] sm:$0x1]
    %401 = vrot.lane.b32.xlu0 %v400, 70
    %v402 = vpop.permute.xlu0 %401
    %vm403 = vcmask 597552
    %s404 = scalar_lea.vmem [#allocation0], 8
    %405 = vst.msk [vmem:[%s404] sm:$0x1] %vm403, %v402
    %s406 = scalar_lea.vmem %s0, 23
    %v407 = vld [vmem:[%s406] sm:$0x1]
    %408 = vrot.lane.b32.xlu0 %v407, 69
    %v409 = vpop.permute.xlu0 %408
    %vm410 = vcmask 589352
    %411 = vst.msk [vmem:[#allocation0] sm:$0x1] %vm410, %v409
    %s412 = scalar_lea.vmem %s0, 108
    %v413 = vld [vmem:[%s412] sm:$0x1]
    %414 = vrot.lane.b32.xlu0 %v413, 68
    %v415 = vpop.permute.xlu0 %414
    %vm416 = vcmask 581152
    %s417 = scalar_lea.vmem [#allocation0], 16
    %418 = vst.msk [vmem:[%s417] sm:$0x1] %vm416, %v415
    %s419 = scalar_lea.vmem %s0, 65
    %v420 = vld [vmem:[%s419] sm:$0x1]
    %421 = vrot.lane.b32.xlu0 %v420, 67
    %v422 = vpop.permute.xlu0 %421
    %vm423 = vcmask 572952
    %s424 = scalar_lea.vmem [#allocation0], 8
    %425 = vst.msk [vmem:[%s424] sm:$0x1] %vm423, %v422
    %s426 = scalar_lea.vmem %s0, 22
    %v427 = vld [vmem:[%s426] sm:$0x1]
    %428 = vrot.lane.b32.xlu0 %v427, 66
    %v429 = vpop.permute.xlu0 %428
    %vm430 = vcmask 564752
    %431 = vst.msk [vmem:[#allocation0] sm:$0x1] %vm430, %v429
    %s432 = scalar_lea.vmem %s0, 107
    %v433 = vld [vmem:[%s432] sm:$0x1]
    %434 = vrot.lane.b32.xlu0 %v433, 65
    %v435 = vpop.permute.xlu0 %434
    %vm436 = vcmask 556552
    %s437 = scalar_lea.vmem [#allocation0], 16
    %438 = vst.msk [vmem:[%s437] sm:$0x1] %vm436, %v435
    %s439 = scalar_lea.vmem %s0, 64
    %v440 = vld [vmem:[%s439] sm:$0x1]
    %441 = vrot.lane.b32.xlu0 %v440, 64
    %v442 = vpop.permute.xlu0 %441
    %vm443 = vcmask 548352
    %s444 = scalar_lea.vmem [#allocation0], 8
    %445 = vst.msk [vmem:[%s444] sm:$0x1] %vm443, %v442
    %s446 = scalar_lea.vmem %s0, 21
    %v447 = vld [vmem:[%s446] sm:$0x1]
    %448 = vrot.lane.b32.xlu0 %v447, 63
    %v449 = vpop.permute.xlu0 %448
    %vm450 = vcmask 540152
    %451 = vst.msk [vmem:[#allocation0] sm:$0x1] %vm450, %v449
    %s452 = scalar_lea.vmem %s0, 106
    %v453 = vld [vmem:[%s452] sm:$0x1]
    %454 = vrot.lane.b32.xlu0 %v453, 62
    %v455 = vpop.permute.xlu0 %454
    %vm456 = vcmask 531952
    %s457 = scalar_lea.vmem [#allocation0], 16
    %458 = vst.msk [vmem:[%s457] sm:$0x1] %vm456, %v455
    %s459 = scalar_lea.vmem %s0, 63
    %v460 = vld [vmem:[%s459] sm:$0x1]
    %461 = vrot.lane.b32.xlu0 %v460, 61
    %v462 = vpop.permute.xlu0 %461
    %vm463 = vcmask 523752
    %s464 = scalar_lea.vmem [#allocation0], 8
    %465 = vst.msk [vmem:[%s464] sm:$0x1] %vm463, %v462
    %s466 = scalar_lea.vmem %s0, 20
    %v467 = vld [vmem:[%s466] sm:$0x1]
    %468 = vrot.lane.b32.xlu0 %v467, 60
    %v469 = vpop.permute.xlu0 %468
    %vm470 = vcmask 515552
    %471 = vst.msk [vmem:[#allocation0] sm:$0x1] %vm470, %v469
    %s472 = scalar_lea.vmem %s0, 105
    %v473 = vld [vmem:[%s472] sm:$0x1]
    %474 = vrot.lane.b32.xlu0 %v473, 59
    %v475 = vpop.permute.xlu0 %474
    %vm476 = vcmask 507352
    %s477 = scalar_lea.vmem [#allocation0], 16
    %478 = vst.msk [vmem:[%s477] sm:$0x1] %vm476, %v475
    %s479 = scalar_lea.vmem %s0, 62
    %v480 = vld [vmem:[%s479] sm:$0x1]
    %481 = vrot.lane.b32.xlu0 %v480, 58
    %v482 = vpop.permute.xlu0 %481
    %vm483 = vcmask 499152
    %s484 = scalar_lea.vmem [#allocation0], 8
    %485 = vst.msk [vmem:[%s484] sm:$0x1] %vm483, %v482
    %s486 = scalar_lea.vmem %s0, 19
    %v487 = vld [vmem:[%s486] sm:$0x1]
    %488 = vrot.lane.b32.xlu0 %v487, 57
    %v489 = vpop.permute.xlu0 %488
    %vm490 = vcmask 490952
    %491 = vst.msk [vmem:[#allocation0] sm:$0x1] %vm490, %v489
    %s492 = scalar_lea.vmem %s0, 104
    %v493 = vld [vmem:[%s492] sm:$0x1]
    %494 = vrot.lane.b32.xlu0 %v493, 56
    %v495 = vpop.permute.xlu0 %494
    %vm496 = vcmask 482752
    %s497 = scalar_lea.vmem [#allocation0], 16
    %498 = vst.msk [vmem:[%s497] sm:$0x1] %vm496, %v495
    %s499 = scalar_lea.vmem %s0, 61
    %v500 = vld [vmem:[%s499] sm:$0x1]
    %501 = vrot.lane.b32.xlu0 %v500, 55
    %v502 = vpop.permute.xlu0 %501
    %vm503 = vcmask 474552
    %s504 = scalar_lea.vmem [#allocation0], 8
    %505 = vst.msk [vmem:[%s504] sm:$0x1] %vm503, %v502
    %s506 = scalar_lea.vmem %s0, 18
    %v507 = vld [vmem:[%s506] sm:$0x1]
    %508 = vrot.lane.b32.xlu0 %v507, 54
    %v509 = vpop.permute.xlu0 %508
    %vm510 = vcmask 466352
    %511 = vst.msk [vmem:[#allocation0] sm:$0x1] %vm510, %v509
    %s512 = scalar_lea.vmem %s0, 103
    %v513 = vld [vmem:[%s512] sm:$0x1]
    %514 = vrot.lane.b32.xlu0 %v513, 53
    %v515 = vpop.permute.xlu0 %514
    %vm516 = vcmask 458152
    %s517 = scalar_lea.vmem [#allocation0], 16
    %518 = vst.msk [vmem:[%s517] sm:$0x1] %vm516, %v515
    %s519 = scalar_lea.vmem %s0, 60
    %v520 = vld [vmem:[%s519] sm:$0x1]
    %521 = vrot.lane.b32.xlu0 %v520, 52
    %v522 = vpop.permute.xlu0 %521
    %vm523 = vcmask 449952
    %s524 = scalar_lea.vmem [#allocation0], 8
    %525 = vst.msk [vmem:[%s524] sm:$0x1] %vm523, %v522
    %s526 = scalar_lea.vmem %s0, 17
    %v527 = vld [vmem:[%s526] sm:$0x1]
    %528 = vrot.lane.b32.xlu0 %v527, 51
    %v529 = vpop.permute.xlu0 %528
    %vm530 = vcmask 441752
    %531 = vst.msk [vmem:[#allocation0] sm:$0x1] %vm530, %v529
    %s532 = scalar_lea.vmem %s0, 102
    %v533 = vld [vmem:[%s532] sm:$0x1]
    %534 = vrot.lane.b32.xlu0 %v533, 50
    %v535 = vpop.permute.xlu0 %534
    %vm536 = vcmask 433552
    %s537 = scalar_lea.vmem [#allocation0], 16
    %538 = vst.msk [vmem:[%s537] sm:$0x1] %vm536, %v535
    %s539 = scalar_lea.vmem %s0, 59
    %v540 = vld [vmem:[%s539] sm:$0x1]
    %541 = vrot.lane.b32.xlu0 %v540, 49
    %v542 = vpop.permute.xlu0 %541
    %vm543 = vcmask 425352
    %s544 = scalar_lea.vmem [#allocation0], 8
    %545 = vst.msk [vmem:[%s544] sm:$0x1] %vm543, %v542
    %s546 = scalar_lea.vmem %s0, 16
    %v547 = vld [vmem:[%s546] sm:$0x1]
    %548 = vrot.lane.b32.xlu0 %v547, 48
    %v549 = vpop.permute.xlu0 %548
    %vm550 = vcmask 417152
    %551 = vst.msk [vmem:[#allocation0] sm:$0x1] %vm550, %v549
    %s552 = scalar_lea.vmem %s0, 101
    %v553 = vld [vmem:[%s552] sm:$0x1]
    %554 = vrot.lane.b32.xlu0 %v553, 47
    %v555 = vpop.permute.xlu0 %554
    %vm556 = vcmask 408952
    %s557 = scalar_lea.vmem [#allocation0], 16
    %558 = vst.msk [vmem:[%s557] sm:$0x1] %vm556, %v555
    %s559 = scalar_lea.vmem %s0, 58
    %v560 = vld [vmem:[%s559] sm:$0x1]
    %561 = vrot.lane.b32.xlu0 %v560, 46
    %v562 = vpop.permute.xlu0 %561
    %vm563 = vcmask 400752
    %s564 = scalar_lea.vmem [#allocation0], 8
    %565 = vst.msk [vmem:[%s564] sm:$0x1] %vm563, %v562
    %s566 = scalar_lea.vmem %s0, 15
    %v567 = vld [vmem:[%s566] sm:$0x1]
    %568 = vrot.lane.b32.xlu0 %v567, 45
    %v569 = vpop.permute.xlu0 %568
    %vm570 = vcmask 392552
    %571 = vst.msk [vmem:[#allocation0] sm:$0x1] %vm570, %v569
    %s572 = scalar_lea.vmem %s0, 100
    %v573 = vld [vmem:[%s572] sm:$0x1]
    %574 = vrot.lane.b32.xlu0 %v573, 44
    %v575 = vpop.permute.xlu0 %574
    %vm576 = vcmask 384352
    %s577 = scalar_lea.vmem [#allocation0], 16
    %578 = vst.msk [vmem:[%s577] sm:$0x1] %vm576, %v575
    %s579 = scalar_lea.vmem %s0, 57
    %v580 = vld [vmem:[%s579] sm:$0x1]
    %581 = vrot.lane.b32.xlu0 %v580, 43
    %v582 = vpop.permute.xlu0 %581
    %vm583 = vcmask 376152
    %s584 = scalar_lea.vmem [#allocation0], 8
    %585 = vst.msk [vmem:[%s584] sm:$0x1] %vm583, %v582
    %s586 = scalar_lea.vmem %s0, 14
    %v587 = vld [vmem:[%s586] sm:$0x1]
    %588 = vrot.lane.b32.xlu0 %v587, 42
    %v589 = vpop.permute.xlu0 %588
    %vm590 = vcmask 367952
    %591 = vst.msk [vmem:[#allocation0] sm:$0x1] %vm590, %v589
    %s592 = scalar_lea.vmem %s0, 99
    %v593 = vld [vmem:[%s592] sm:$0x1]
    %594 = vrot.lane.b32.xlu0 %v593, 41
    %v595 = vpop.permute.xlu0 %594
    %vm596 = vcmask 359752
    %s597 = scalar_lea.vmem [#allocation0], 16
    %598 = vst.msk [vmem:[%s597] sm:$0x1] %vm596, %v595
    %s599 = scalar_lea.vmem %s0, 56
    %v600 = vld [vmem:[%s599] sm:$0x1]
    %601 = vrot.lane.b32.xlu0 %v600, 40
    %v602 = vpop.permute.xlu0 %601
    %vm603 = vcmask 351552
    %s604 = scalar_lea.vmem [#allocation0], 8
    %605 = vst.msk [vmem:[%s604] sm:$0x1] %vm603, %v602
    %s606 = scalar_lea.vmem %s0, 13
    %v607 = vld [vmem:[%s606] sm:$0x1]
    %608 = vrot.lane.b32.xlu0 %v607, 39
    %v609 = vpop.permute.xlu0 %608
    %vm610 = vcmask 343352
    %611 = vst.msk [vmem:[#allocation0] sm:$0x1] %vm610, %v609
    %s612 = scalar_lea.vmem %s0, 98
    %v613 = vld [vmem:[%s612] sm:$0x1]
    %614 = vrot.lane.b32.xlu0 %v613, 38
    %v615 = vpop.permute.xlu0 %614
    %vm616 = vcmask 335152
    %s617 = scalar_lea.vmem [#allocation0], 16
    %618 = vst.msk [vmem:[%s617] sm:$0x1] %vm616, %v615
    %s619 = scalar_lea.vmem %s0, 55
    %v620 = vld [vmem:[%s619] sm:$0x1]
    %621 = vrot.lane.b32.xlu0 %v620, 37
    %v622 = vpop.permute.xlu0 %621
    %vm623 = vcmask 326952
    %s624 = scalar_lea.vmem [#allocation0], 8
    %625 = vst.msk [vmem:[%s624] sm:$0x1] %vm623, %v622
    %s626 = scalar_lea.vmem %s0, 12
    %v627 = vld [vmem:[%s626] sm:$0x1]
    %628 = vrot.lane.b32.xlu0 %v627, 36
    %v629 = vpop.permute.xlu0 %628
    %vm630 = vcmask 318752
    %631 = vst.msk [vmem:[#allocation0] sm:$0x1] %vm630, %v629
    %s632 = scalar_lea.vmem %s0, 97
    %v633 = vld [vmem:[%s632] sm:$0x1]
    %634 = vrot.lane.b32.xlu0 %v633, 35
    %v635 = vpop.permute.xlu0 %634
    %vm636 = vcmask 310552
    %s637 = scalar_lea.vmem [#allocation0], 16
    %638 = vst.msk [vmem:[%s637] sm:$0x1] %vm636, %v635
    %s639 = scalar_lea.vmem %s0, 54
    %v640 = vld [vmem:[%s639] sm:$0x1]
    %641 = vrot.lane.b32.xlu0 %v640, 34
    %v642 = vpop.permute.xlu0 %641
    %vm643 = vcmask 302352
    %s644 = scalar_lea.vmem [#allocation0], 8
    %645 = vst.msk [vmem:[%s644] sm:$0x1] %vm643, %v642
    %s646 = scalar_lea.vmem %s0, 11
    %v647 = vld [vmem:[%s646] sm:$0x1]
    %648 = vrot.lane.b32.xlu0 %v647, 33
    %v649 = vpop.permute.xlu0 %648
    %vm650 = vcmask 294152
    %651 = vst.msk [vmem:[#allocation0] sm:$0x1] %vm650, %v649
    %s652 = scalar_lea.vmem %s0, 96
    %v653 = vld [vmem:[%s652] sm:$0x1]
    %654 = vrot.lane.b32.xlu0 %v653, 32
    %v655 = vpop.permute.xlu0 %654
    %vm656 = vcmask 285952
    %s657 = scalar_lea.vmem [#allocation0], 16
    %658 = vst.msk [vmem:[%s657] sm:$0x1] %vm656, %v655
    %s659 = scalar_lea.vmem %s0, 53
    %v660 = vld [vmem:[%s659] sm:$0x1]
    %661 = vrot.lane.b32.xlu0 %v660, 31
    %v662 = vpop.permute.xlu0 %661
    %vm663 = vcmask 277752
    %s664 = scalar_lea.vmem [#allocation0], 8
    %665 = vst.msk [vmem:[%s664] sm:$0x1] %vm663, %v662
    %s666 = scalar_lea.vmem %s0, 10
    %v667 = vld [vmem:[%s666] sm:$0x1]
    %668 = vrot.lane.b32.xlu0 %v667, 30
    %v669 = vpop.permute.xlu0 %668
    %vm670 = vcmask 269552
    %671 = vst.msk [vmem:[#allocation0] sm:$0x1] %vm670, %v669
    %s672 = scalar_lea.vmem %s0, 95
    %v673 = vld [vmem:[%s672] sm:$0x1]
    %674 = vrot.lane.b32.xlu0 %v673, 29
    %v675 = vpop.permute.xlu0 %674
    %vm676 = vcmask 261352
    %s677 = scalar_lea.vmem [#allocation0], 16
    %678 = vst.msk [vmem:[%s677] sm:$0x1] %vm676, %v675
    %s679 = scalar_lea.vmem %s0, 52
    %v680 = vld [vmem:[%s679] sm:$0x1]
    %681 = vrot.lane.b32.xlu0 %v680, 28
    %v682 = vpop.permute.xlu0 %681
    %vm683 = vcmask 253152
    %s684 = scalar_lea.vmem [#allocation0], 8
    %685 = vst.msk [vmem:[%s684] sm:$0x1] %vm683, %v682
    %s686 = scalar_lea.vmem %s0, 9
    %v687 = vld [vmem:[%s686] sm:$0x1]
    %688 = vrot.lane.b32.xlu0 %v687, 27
    %v689 = vpop.permute.xlu0 %688
    %vm690 = vcmask 244952
    %691 = vst.msk [vmem:[#allocation0] sm:$0x1] %vm690, %v689
    %s692 = scalar_lea.vmem %s0, 94
    %v693 = vld [vmem:[%s692] sm:$0x1]
    %694 = vrot.lane.b32.xlu0 %v693, 26
    %v695 = vpop.permute.xlu0 %694
    %vm696 = vcmask 236752
    %s697 = scalar_lea.vmem [#allocation0], 16
    %698 = vst.msk [vmem:[%s697] sm:$0x1] %vm696, %v695
    %s699 = scalar_lea.vmem %s0, 51
    %v700 = vld [vmem:[%s699] sm:$0x1]
    %701 = vrot.lane.b32.xlu0 %v700, 25
    %v702 = vpop.permute.xlu0 %701
    %vm703 = vcmask 228552
    %s704 = scalar_lea.vmem [#allocation0], 8
    %705 = vst.msk [vmem:[%s704] sm:$0x1] %vm703, %v702
    %s706 = scalar_lea.vmem %s0, 8
    %v707 = vld [vmem:[%s706] sm:$0x1]
    %708 = vrot.lane.b32.xlu0 %v707, 24
    %v709 = vpop.permute.xlu0 %708
    %vm710 = vcmask 220352
    %711 = vst.msk [vmem:[#allocation0] sm:$0x1] %vm710, %v709
    %s712 = scalar_lea.vmem %s0, 93
    %v713 = vld [vmem:[%s712] sm:$0x1]
    %714 = vrot.lane.b32.xlu0 %v713, 23
    %v715 = vpop.permute.xlu0 %714
    %vm716 = vcmask 212152
    %s717 = scalar_lea.vmem [#allocation0], 16
    %718 = vst.msk [vmem:[%s717] sm:$0x1] %vm716, %v715
    %s719 = scalar_lea.vmem %s0, 50
    %v720 = vld [vmem:[%s719] sm:$0x1]
    %721 = vrot.lane.b32.xlu0 %v720, 22
    %v722 = vpop.permute.xlu0 %721
    %vm723 = vcmask 203952
    %s724 = scalar_lea.vmem [#allocation0], 8
    %725 = vst.msk [vmem:[%s724] sm:$0x1] %vm723, %v722
    %s726 = scalar_lea.vmem %s0, 7
    %v727 = vld [vmem:[%s726] sm:$0x1]
    %728 = vrot.lane.b32.xlu0 %v727, 21
    %v729 = vpop.permute.xlu0 %728
    %vm730 = vcmask 195752
    %731 = vst.msk [vmem:[#allocation0] sm:$0x1] %vm730, %v729
    %s732 = scalar_lea.vmem %s0, 92
    %v733 = vld [vmem:[%s732] sm:$0x1]
    %734 = vrot.lane.b32.xlu0 %v733, 20
    %v735 = vpop.permute.xlu0 %734
    %vm736 = vcmask 187552
    %s737 = scalar_lea.vmem [#allocation0], 16
    %738 = vst.msk [vmem:[%s737] sm:$0x1] %vm736, %v735
    %s739 = scalar_lea.vmem %s0, 49
    %v740 = vld [vmem:[%s739] sm:$0x1]
    %741 = vrot.lane.b32.xlu0 %v740, 19
    %v742 = vpop.permute.xlu0 %741
    %vm743 = vcmask 179352
    %s744 = scalar_lea.vmem [#allocation0], 8
    %745 = vst.msk [vmem:[%s744] sm:$0x1] %vm743, %v742
    %s746 = scalar_lea.vmem %s0, 6
    %v747 = vld [vmem:[%s746] sm:$0x1]
    %748 = vrot.lane.b32.xlu0 %v747, 18
    %v749 = vpop.permute.xlu0 %748
    %vm750 = vcmask 171152
    %751 = vst.msk [vmem:[#allocation0] sm:$0x1] %vm750, %v749
    %s752 = scalar_lea.vmem %s0, 91
    %v753 = vld [vmem:[%s752] sm:$0x1]
    %754 = vrot.lane.b32.xlu0 %v753, 17
    %v755 = vpop.permute.xlu0 %754
    %vm756 = vcmask 162952
    %s757 = scalar_lea.vmem [#allocation0], 16
    %758 = vst.msk [vmem:[%s757] sm:$0x1] %vm756, %v755
    %s759 = scalar_lea.vmem %s0, 48
    %v760 = vld [vmem:[%s759] sm:$0x1]
    %761 = vrot.lane.b32.xlu0 %v760, 16
    %v762 = vpop.permute.xlu0 %761
    %vm763 = vcmask 154752
    %s764 = scalar_lea.vmem [#allocation0], 8
    %765 = vst.msk [vmem:[%s764] sm:$0x1] %vm763, %v762
    %s766 = scalar_lea.vmem %s0, 5
    %v767 = vld [vmem:[%s766] sm:$0x1]
    %768 = vrot.lane.b32.xlu0 %v767, 15
    %v769 = vpop.permute.xlu0 %768
    %vm770 = vcmask 146552
    %771 = vst.msk [vmem:[#allocation0] sm:$0x1] %vm770, %v769
    %s772 = scalar_lea.vmem %s0, 90
    %v773 = vld [vmem:[%s772] sm:$0x1]
    %774 = vrot.lane.b32.xlu0 %v773, 14
    %v775 = vpop.permute.xlu0 %774
    %vm776 = vcmask 138352
    %s777 = scalar_lea.vmem [#allocation0], 16
    %778 = vst.msk [vmem:[%s777] sm:$0x1] %vm776, %v775
    %s779 = scalar_lea.vmem %s0, 47
    %v780 = vld [vmem:[%s779] sm:$0x1]
    %781 = vrot.lane.b32.xlu0 %v780, 13
    %v782 = vpop.permute.xlu0 %781
    %vm783 = vcmask 130152
    %s784 = scalar_lea.vmem [#allocation0], 8
    %785 = vst.msk [vmem:[%s784] sm:$0x1] %vm783, %v782
    %s786 = scalar_lea.vmem %s0, 4
    %v787 = vld [vmem:[%s786] sm:$0x1]
    %788 = vrot.lane.b32.xlu0 %v787, 12
    %v789 = vpop.permute.xlu0 %788
    %vm790 = vcmask 121952
    %791 = vst.msk [vmem:[#allocation0] sm:$0x1] %vm790, %v789
    %s792 = scalar_lea.vmem %s0, 89
    %v793 = vld [vmem:[%s792] sm:$0x1]
    %794 = vrot.lane.b32.xlu0 %v793, 11
    %v795 = vpop.permute.xlu0 %794
    %vm796 = vcmask 113752
    %s797 = scalar_lea.vmem [#allocation0], 16
    %798 = vst.msk [vmem:[%s797] sm:$0x1] %vm796, %v795
    %s799 = scalar_lea.vmem %s0, 46
    %v800 = vld [vmem:[%s799] sm:$0x1]
    %801 = vrot.lane.b32.xlu0 %v800, 10
    %v802 = vpop.permute.xlu0 %801
    %vm803 = vcmask 105552
    %s804 = scalar_lea.vmem [#allocation0], 8
    %805 = vst.msk [vmem:[%s804] sm:$0x1] %vm803, %v802
    %s806 = scalar_lea.vmem %s0, 3
    %v807 = vld [vmem:[%s806] sm:$0x1]
    %808 = vrot.lane.b32.xlu0 %v807, 9
    %v809 = vpop.permute.xlu0 %808
    %vm810 = vcmask 97352
    %811 = vst.msk [vmem:[#allocation0] sm:$0x1] %vm810, %v809
    %s812 = scalar_lea.vmem %s0, 88
    %v813 = vld [vmem:[%s812] sm:$0x1]
    %814 = vrot.lane.b32.xlu0 %v813, 8
    %v815 = vpop.permute.xlu0 %814
    %vm816 = vcmask 89152
    %s817 = scalar_lea.vmem [#allocation0], 16
    %818 = vst.msk [vmem:[%s817] sm:$0x1] %vm816, %v815
    %s819 = scalar_lea.vmem %s0, 45
    %v820 = vld [vmem:[%s819] sm:$0x1]
    %821 = vrot.lane.b32.xlu0 %v820, 7
    %v822 = vpop.permute.xlu0 %821
    %vm823 = vcmask 80952
    %s824 = scalar_lea.vmem [#allocation0], 8
    %825 = vst.msk [vmem:[%s824] sm:$0x1] %vm823, %v822
    %s826 = scalar_lea.vmem %s0, 2
    %v827 = vld [vmem:[%s826] sm:$0x1]
    %828 = vrot.lane.b32.xlu0 %v827, 6
    %v829 = vpop.permute.xlu0 %828
    %vm830 = vcmask 72752
    %831 = vst.msk [vmem:[#allocation0] sm:$0x1] %vm830, %v829
    %s832 = scalar_lea.vmem %s0, 87
    %v833 = vld [vmem:[%s832] sm:$0x1]
    %834 = vrot.lane.b32.xlu0 %v833, 5
    %v835 = vpop.permute.xlu0 %834
    %vm836 = vcmask 64552
    %s837 = scalar_lea.vmem [#allocation0], 16
    %838 = vst.msk [vmem:[%s837] sm:$0x1] %vm836, %v835
    %s839 = scalar_lea.vmem %s0, 44
    %v840 = vld [vmem:[%s839] sm:$0x1]
    %841 = vrot.lane.b32.xlu0 %v840, 4
    %v842 = vpop.permute.xlu0 %841
    %vm843 = vcmask 56352
    %s844 = scalar_lea.vmem [#allocation0], 8
    %845 = vst.msk [vmem:[%s844] sm:$0x1] %vm843, %v842
    %s846 = scalar_lea.vmem %s0, 1
    %v847 = vld [vmem:[%s846] sm:$0x1]
    %848 = vrot.lane.b32.xlu0 %v847, 3
    %v849 = vpop.permute.xlu0 %848
    %vm850 = vcmask 48152
    %851 = vst.msk [vmem:[#allocation0] sm:$0x1] %vm850, %v849
    %s852 = scalar_lea.vmem %s0, 86
    %v853 = vld [vmem:[%s852] sm:$0x1]
    %854 = vrot.lane.b32.xlu0 %v853, 2
    %v855 = vpop.permute.xlu0 %854
    %vm856 = vcmask 39952
    %s857 = scalar_lea.vmem [#allocation0], 16
    %858 = vst.msk [vmem:[%s857] sm:$0x1] %vm856, %v855
    %s859 = scalar_lea.vmem %s0, 43
    %v860 = vld [vmem:[%s859] sm:$0x1]
    %861 = vrot.lane.b32.xlu0 %v860, 1
    %v862 = vpop.permute.xlu0 %861
    %vm863 = vcmask 31752
    %s864 = scalar_lea.vmem [#allocation0], 8
    %865 = vst.msk [vmem:[%s864] sm:$0x1] %vm863, %v862
    %s867 = sshllo.u32 0, 1
    %v869 = vld [vmem:[#allocation0] sm:%s867]
    %s870 = sshllo.u32 0, 1
    %871 = vst [vmem:[%s1] sm:%s870] %v869
    %s872 = scalar_lea.vmem [#allocation0], 8
    %v873 = vld [vmem:[%s872] sm:%s867]
    %s874 = sshllo.u32 0, 1
    %s875 = scalar_lea.vmem %s1, 1
    %876 = vst [vmem:[%s875] sm:%s874] %v873
    %s877 = scalar_lea.vmem [#allocation0], 16
    %v878 = vld [vmem:[%s877] sm:%s867]
    %s879 = sshllo.u32 0, 1
    %s880 = smul.addr 1, 2
    %s881 = scalar_lea.vmem %s1, %s880
    %882 = vst [vmem:[%s881] sm:%s879] %v878

// kernel: ann_linear_forward.1
$region0: #{ann_linear_forward.1}
  #allocation0 [shape = 'u32[]', space=smem, size = 0x4, offset = 0x4, fixed_abs, tag = 'smem constant byte address 0x4 - core index']
  #allocation1 [shape = 'u32[144,128]{1,0:T(1,128)}', space=vmem, size = 0x12000, scoped, tag = 'internal scratch']
  %s0 = inlined_call_operand.vmem [shape: f32[8,512], index: 0, kind: input, shape index: {}]
  %s1 = inlined_call_operand.vmem [shape: f32[512,384], index: 1, kind: input, shape index: {}]
  %s2 = inlined_call_operand.vmem [shape: f32[1,384], index: 2, kind: input, shape index: {}]
  %s3 = inlined_call_operand.vmem [shape: f32[8,384], index: 3, kind: output, shape index: {}]
  %s4 = sld [smem:[#allocation0]]
  $region22: #{ann_linear_forward.1} parent=0
    _
  %s6 = ssub.s32 1, %s4
  %s7 = scalar_select 0, %s6, %s4
  // Predicated region
  $region2: #{ann_linear_forward.1} parent=0 // pred_check
    _
  $region3: #{ann_linear_forward.1} parent=0 // pred_check_branch
    %9 = sbr.rel (0) target = $region5
  $region4: #{ann_linear_forward.1} parent=0 // pred_region
    _
  $region5: #{ann_linear_forward.1} parent=0 // pred_fallthru
    _
  // Predicated region
  $region6: #{ann_linear_forward.1} parent=0 // pred_check
    _
  $region7: #{ann_linear_forward.1} parent=0 // pred_check_branch
    %11 = sbr.rel (0) target = $region9
  $region8: #{ann_linear_forward.1} parent=0 // pred_region
    _
  $region9: #{ann_linear_forward.1} parent=0 // pred_fallthru
    _
  // Predicated region
  $region10: #{ann_linear_forward.1} parent=0 // pred_check
    _
  $region11: #{ann_linear_forward.1} parent=0 // pred_check_branch
    %13 = sbr.rel (0) target = $region13
  $region12: #{ann_linear_forward.1} parent=0 // pred_region
    _
  $region13: #{ann_linear_forward.1} parent=0 // pred_fallthru
    _
  %v14 = vld [vmem:[%s0] sm:$0xff]
  %v15 = vld [vmem:[%s0 + $0x8] sm:$0xff]
  %v16 = vld [vmem:[%s0 + $0x10] sm:$0xff]
  %v17 = vld [vmem:[%s0 + $0x18] sm:$0xff]
  %v18 = vld [vmem:[%s1] sm:$0xff]
  %v19 = vld [vmem:[%s1 + $0x8] sm:$0xff]
  %v20 = vld [vmem:[%s1 + $0x10] sm:$0xff]
  %v21 = vld [vmem:[%s1 + $0x18] sm:$0xff]
  %v22 = vld [vmem:[%s1 + $0x20] sm:$0xff]
  %v23 = vld [vmem:[%s1 + $0x28] sm:$0xff]
  %v24 = vld [vmem:[%s1 + $0x30] sm:$0xff]
  %v25 = vld [vmem:[%s1 + $0x38] sm:$0xff]
  %v26 = vld [vmem:[%s1 + $0x40] sm:$0xff]
  %v27 = vld [vmem:[%s1 + $0x48] sm:$0xff]
  %v28 = vld [vmem:[%s1 + $0x50] sm:$0xff]
  %v29 = vld [vmem:[%s1 + $0x58] sm:$0xff]
  %v30 = vld [vmem:[%s1 + $0x60] sm:$0xff]
  %v31 = vld [vmem:[%s1 + $0x68] sm:$0xff]
  %v32 = vld [vmem:[%s1 + $0x70] sm:$0xff]
  %v33 = vld [vmem:[%s1 + $0x78] sm:$0xff]
  %v34 = vld [vmem:[%s1 + $0x80] sm:$0xff]
  %v35 = vld [vmem:[%s1 + $0x88] sm:$0xff]
  %v36 = vld [vmem:[%s1 + $0x90] sm:$0xff]
  %v37 = vld [vmem:[%s1 + $0x98] sm:$0xff]
  %v38 = vld [vmem:[%s1 + $0xa0] sm:$0xff]
  %v39 = vld [vmem:[%s1 + $0xa8] sm:$0xff]
  %v40 = vld [vmem:[%s1 + $0xb0] sm:$0xff]
  %v41 = vld [vmem:[%s1 + $0xb8] sm:$0xff]
  %v42 = vld [vmem:[%s1 + $0xc0] sm:$0xff]
  %v43 = vld [vmem:[%s1 + $0xc8] sm:$0xff]
  %v44 = vld [vmem:[%s1 + $0xd0] sm:$0xff]
  %v45 = vld [vmem:[%s1 + $0xd8] sm:$0xff]
  %v46 = vld [vmem:[%s1 + $0xe0] sm:$0xff]
  %v47 = vld [vmem:[%s1 + $0xe8] sm:$0xff]
  %v48 = vld [vmem:[%s1 + $0xf0] sm:$0xff]
  %v49 = vld [vmem:[%s1 + $0xf8] sm:$0xff]
  %v50 = vld [vmem:[%s1 + $0x100] sm:$0xff]
  %v51 = vld [vmem:[%s1 + $0x108] sm:$0xff]
  %v52 = vld [vmem:[%s1 + $0x110] sm:$0xff]
  %v53 = vld [vmem:[%s1 + $0x118] sm:$0xff]
  %v54 = vld [vmem:[%s1 + $0x120] sm:$0xff]
  %v55 = vld [vmem:[%s1 + $0x128] sm:$0xff]
  %v56 = vld [vmem:[%s1 + $0x130] sm:$0xff]
  %v57 = vld [vmem:[%s1 + $0x138] sm:$0xff]
  %v58 = vld [vmem:[%s1 + $0x140] sm:$0xff]
  %v59 = vld [vmem:[%s1 + $0x148] sm:$0xff]
  %v60 = vld [vmem:[%s1 + $0x150] sm:$0xff]
  %v61 = vld [vmem:[%s1 + $0x158] sm:$0xff]
  %v62 = vld [vmem:[%s1 + $0x160] sm:$0xff]
  %v63 = vld [vmem:[%s1 + $0x168] sm:$0xff]
  %v64 = vld [vmem:[%s1 + $0x170] sm:$0xff]
  %v65 = vld [vmem:[%s1 + $0x178] sm:$0xff]
  %v66 = vld [vmem:[%s1 + $0x180] sm:$0xff]
  %v67 = vld [vmem:[%s1 + $0x188] sm:$0xff]
  %v68 = vld [vmem:[%s1 + $0x190] sm:$0xff]
  %v69 = vld [vmem:[%s1 + $0x198] sm:$0xff]
  %v70 = vld [vmem:[%s1 + $0x1a0] sm:$0xff]
  %v71 = vld [vmem:[%s1 + $0x1a8] sm:$0xff]
  %v72 = vld [vmem:[%s1 + $0x1b0] sm:$0xff]
  %v73 = vld [vmem:[%s1 + $0x1b8] sm:$0xff]
  %v74 = vld [vmem:[%s1 + $0x1c0] sm:$0xff]
  %v75 = vld [vmem:[%s1 + $0x1c8] sm:$0xff]
  %v76 = vld [vmem:[%s1 + $0x1d0] sm:$0xff]
  %v77 = vld [vmem:[%s1 + $0x1d8] sm:$0xff]
  %v78 = vld [vmem:[%s1 + $0x1e0] sm:$0xff]
  %v79 = vld [vmem:[%s1 + $0x1e8] sm:$0xff]
  %v80 = vld [vmem:[%s1 + $0x1f0] sm:$0xff]
  %v81 = vld [vmem:[%s1 + $0x1f8] sm:$0xff]
  %v82 = vld [vmem:[%s1 + $0x200] sm:$0xff]
  %v83 = vld [vmem:[%s1 + $0x208] sm:$0xff]
  %v84 = vld [vmem:[%s1 + $0x210] sm:$0xff]
  %v85 = vld [vmem:[%s1 + $0x218] sm:$0xff]
  %v86 = vld [vmem:[%s1 + $0x220] sm:$0xff]
  %v87 = vld [vmem:[%s1 + $0x228] sm:$0xff]
  %v88 = vld [vmem:[%s1 + $0x230] sm:$0xff]
  %v89 = vld [vmem:[%s1 + $0x238] sm:$0xff]
  %v90 = vld [vmem:[%s1 + $0x240] sm:$0xff]
  %v91 = vld [vmem:[%s1 + $0x248] sm:$0xff]
  %v92 = vld [vmem:[%s1 + $0x250] sm:$0xff]
  %v93 = vld [vmem:[%s1 + $0x258] sm:$0xff]
  %v94 = vld [vmem:[%s1 + $0x260] sm:$0xff]
  %v95 = vld [vmem:[%s1 + $0x268] sm:$0xff]
  %v96 = vld [vmem:[%s1 + $0x270] sm:$0xff]
  %v97 = vld [vmem:[%s1 + $0x278] sm:$0xff]
  %v98 = vld [vmem:[%s1 + $0x280] sm:$0xff]
  %v99 = vld [vmem:[%s1 + $0x288] sm:$0xff]
  %v100 = vld [vmem:[%s1 + $0x290] sm:$0xff]
  %v101 = vld [vmem:[%s1 + $0x298] sm:$0xff]
  %v102 = vld [vmem:[%s1 + $0x2a0] sm:$0xff]
  %v103 = vld [vmem:[%s1 + $0x2a8] sm:$0xff]
  %v104 = vld [vmem:[%s1 + $0x2b0] sm:$0xff]
  %v105 = vld [vmem:[%s1 + $0x2b8] sm:$0xff]
  %v106 = vld [vmem:[%s1 + $0x2c0] sm:$0xff]
  %v107 = vld [vmem:[%s1 + $0x2c8] sm:$0xff]
  %v108 = vld [vmem:[%s1 + $0x2d0] sm:$0xff]
  %v109 = vld [vmem:[%s1 + $0x2d8] sm:$0xff]
  %v110 = vld [vmem:[%s1 + $0x2e0] sm:$0xff]
  %v111 = vld [vmem:[%s1 + $0x2e8] sm:$0xff]
  %v112 = vld [vmem:[%s1 + $0x2f0] sm:$0xff]
  %v113 = vld [vmem:[%s1 + $0x2f8] sm:$0xff]
  %v114 = vld [vmem:[%s1 + $0x300] sm:$0xff]
  %v115 = vld [vmem:[%s1 + $0x308] sm:$0xff]
  %v116 = vld [vmem:[%s1 + $0x310] sm:$0xff]
  %v117 = vld [vmem:[%s1 + $0x318] sm:$0xff]
  %v118 = vld [vmem:[%s1 + $0x320] sm:$0xff]
  %v119 = vld [vmem:[%s1 + $0x328] sm:$0xff]
  %v120 = vld [vmem:[%s1 + $0x330] sm:$0xff]
  %v121 = vld [vmem:[%s1 + $0x338] sm:$0xff]
  %v122 = vld [vmem:[%s1 + $0x340] sm:$0xff]
  %v123 = vld [vmem:[%s1 + $0x348] sm:$0xff]
  %v124 = vld [vmem:[%s1 + $0x350] sm:$0xff]
  %v125 = vld [vmem:[%s1 + $0x358] sm:$0xff]
  %v126 = vld [vmem:[%s1 + $0x360] sm:$0xff]
  %v127 = vld [vmem:[%s1 + $0x368] sm:$0xff]
  %v128 = vld [vmem:[%s1 + $0x370] sm:$0xff]
  %v129 = vld [vmem:[%s1 + $0x378] sm:$0xff]
  %v130 = vld [vmem:[%s1 + $0x380] sm:$0xff]
  %v131 = vld [vmem:[%s1 + $0x388] sm:$0xff]
  %v132 = vld [vmem:[%s1 + $0x390] sm:$0xff]
  %v133 = vld [vmem:[%s1 + $0x398] sm:$0xff]
  %v134 = vld [vmem:[%s1 + $0x3a0] sm:$0xff]
  %v135 = vld [vmem:[%s1 + $0x3a8] sm:$0xff]
  %v136 = vld [vmem:[%s1 + $0x3b0] sm:$0xff]
  %v137 = vld [vmem:[%s1 + $0x3b8] sm:$0xff]
  %v138 = vld [vmem:[%s1 + $0x3c0] sm:$0xff]
  %v139 = vld [vmem:[%s1 + $0x3c8] sm:$0xff]
  %v140 = vld [vmem:[%s1 + $0x3d0] sm:$0xff]
  %v141 = vld [vmem:[%s1 + $0x3d8] sm:$0xff]
  %v142 = vld [vmem:[%s1 + $0x3e0] sm:$0xff]
  %v143 = vld [vmem:[%s1 + $0x3e8] sm:$0xff]
  %v144 = vld [vmem:[%s1 + $0x3f0] sm:$0xff]
  %v145 = vld [vmem:[%s1 + $0x3f8] sm:$0xff]
  %v146 = vld [vmem:[%s1 + $0x400] sm:$0xff]
  %v147 = vld [vmem:[%s1 + $0x408] sm:$0xff]
  %v148 = vld [vmem:[%s1 + $0x410] sm:$0xff]
  %v149 = vld [vmem:[%s1 + $0x418] sm:$0xff]
  %v150 = vld [vmem:[%s1 + $0x420] sm:$0xff]
  %v151 = vld [vmem:[%s1 + $0x428] sm:$0xff]
  %v152 = vld [vmem:[%s1 + $0x430] sm:$0xff]
  %v153 = vld [vmem:[%s1 + $0x438] sm:$0xff]
  %v154 = vld [vmem:[%s1 + $0x440] sm:$0xff]
  %v155 = vld [vmem:[%s1 + $0x448] sm:$0xff]
  %v156 = vld [vmem:[%s1 + $0x450] sm:$0xff]
  %v157 = vld [vmem:[%s1 + $0x458] sm:$0xff]
  %v158 = vld [vmem:[%s1 + $0x460] sm:$0xff]
  %v159 = vld [vmem:[%s1 + $0x468] sm:$0xff]
  %v160 = vld [vmem:[%s1 + $0x470] sm:$0xff]
  %v161 = vld [vmem:[%s1 + $0x478] sm:$0xff]
  %v162 = vld [vmem:[%s1 + $0x480] sm:$0xff]
  %v163 = vld [vmem:[%s1 + $0x488] sm:$0xff]
  %v164 = vld [vmem:[%s1 + $0x490] sm:$0xff]
  %v165 = vld [vmem:[%s1 + $0x498] sm:$0xff]
  %v166 = vld [vmem:[%s1 + $0x4a0] sm:$0xff]
  %v167 = vld [vmem:[%s1 + $0x4a8] sm:$0xff]
  %v168 = vld [vmem:[%s1 + $0x4b0] sm:$0xff]
  %v169 = vld [vmem:[%s1 + $0x4b8] sm:$0xff]
  %v170 = vld [vmem:[%s1 + $0x4c0] sm:$0xff]
  %v171 = vld [vmem:[%s1 + $0x4c8] sm:$0xff]
  %v172 = vld [vmem:[%s1 + $0x4d0] sm:$0xff]
  %v173 = vld [vmem:[%s1 + $0x4d8] sm:$0xff]
  %v174 = vld [vmem:[%s1 + $0x4e0] sm:$0xff]
  %v175 = vld [vmem:[%s1 + $0x4e8] sm:$0xff]
  %v176 = vld [vmem:[%s1 + $0x4f0] sm:$0xff]
  %v177 = vld [vmem:[%s1 + $0x4f8] sm:$0xff]
  %v178 = vld [vmem:[%s1 + $0x500] sm:$0xff]
  %v179 = vld [vmem:[%s1 + $0x508] sm:$0xff]
  %v180 = vld [vmem:[%s1 + $0x510] sm:$0xff]
  %v181 = vld [vmem:[%s1 + $0x518] sm:$0xff]
  %v182 = vld [vmem:[%s1 + $0x520] sm:$0xff]
  %v183 = vld [vmem:[%s1 + $0x528] sm:$0xff]
  %v184 = vld [vmem:[%s1 + $0x530] sm:$0xff]
  %v185 = vld [vmem:[%s1 + $0x538] sm:$0xff]
  %v186 = vld [vmem:[%s1 + $0x540] sm:$0xff]
  %v187 = vld [vmem:[%s1 + $0x548] sm:$0xff]
  %v188 = vld [vmem:[%s1 + $0x550] sm:$0xff]
  %v189 = vld [vmem:[%s1 + $0x558] sm:$0xff]
  %v190 = vld [vmem:[%s1 + $0x560] sm:$0xff]
  %v191 = vld [vmem:[%s1 + $0x568] sm:$0xff]
  %v192 = vld [vmem:[%s1 + $0x570] sm:$0xff]
  %v193 = vld [vmem:[%s1 + $0x578] sm:$0xff]
  %v194 = vld [vmem:[%s1 + $0x580] sm:$0xff]
  %v195 = vld [vmem:[%s1 + $0x588] sm:$0xff]
  %v196 = vld [vmem:[%s1 + $0x590] sm:$0xff]
  %v197 = vld [vmem:[%s1 + $0x598] sm:$0xff]
  %v198 = vld [vmem:[%s1 + $0x5a0] sm:$0xff]
  %v199 = vld [vmem:[%s1 + $0x5a8] sm:$0xff]
  %v200 = vld [vmem:[%s1 + $0x5b0] sm:$0xff]
  %v201 = vld [vmem:[%s1 + $0x5b8] sm:$0xff]
  %v202 = vld [vmem:[%s1 + $0x5c0] sm:$0xff]
  %v203 = vld [vmem:[%s1 + $0x5c8] sm:$0xff]
  %v204 = vld [vmem:[%s1 + $0x5d0] sm:$0xff]
  %v205 = vld [vmem:[%s1 + $0x5d8] sm:$0xff]
  %v206 = vld [vmem:[%s1 + $0x5e0] sm:$0xff]
  %v207 = vld [vmem:[%s1 + $0x5e8] sm:$0xff]
  %v208 = vld [vmem:[%s1 + $0x5f0] sm:$0xff]
  %v209 = vld [vmem:[%s1 + $0x5f8] sm:$0xff]
  %v210 = vld [vmem:[%s2] sm:$0x7]
  %v212 = vlaneseq
  %v213 = vshrl.u32 %v212, 7
  %v214 = vsub.s32 0, %v213
  %v215 = vrot.slane %v210, %v214
  %v216 = vlaneseq
  %v217 = vshrl.u32 %v216, 7
  %v218 = vsub.s32 1, %v217
  %v219 = vrot.slane %v210, %v218
  %v220 = vlaneseq
  %v221 = vshrl.u32 %v220, 7
  %v222 = vsub.s32 2, %v221
  %v223 = vrot.slane %v210, %v222
  %227 = vmatprep.subr.mxu0 %v19
  %228 = vmatpush1.msra.mxu0 %v18
  %229 = vmatprep.subr.mxu0 %v22
  %230 = vmatpush1.msra.mxu0 %v21
  %231 = vmatprep.subr.mxu0 %v25
  %232 = vmatpush1.msra.mxu0 %v24
  %233 = vmatprep.subr.mxu0 %v28
  %234 = vmatpush1.msra.mxu0 %v27
  %235 = vmatprep.subr.mxu0 %v31
  %236 = vmatpush1.msra.mxu0 %v30
  %237 = vmatprep.subr.mxu0 %v34
  %238 = vmatpush1.msra.mxu0 %v33
  %239 = vmatprep.subr.mxu0 %v37
  %240 = vmatpush1.msra.mxu0 %v36
  %241 = vmatprep.subr.mxu0 %v40
  %242 = vmatpush1.msra.mxu0 %v39
  %243 = vmatprep.subr.mxu0 %v43
  %244 = vmatpush1.msra.mxu0 %v42
  %245 = vmatprep.subr.mxu0 %v46
  %246 = vmatpush1.msra.mxu0 %v45
  %247 = vmatprep.subr.mxu0 %v49
  %248 = vmatpush1.msra.mxu0 %v48
  %249 = vmatprep.subr.mxu0 %v52
  %250 = vmatpush1.msra.mxu0 %v51
  %251 = vmatprep.subr.mxu0 %v55
  %252 = vmatpush1.msra.mxu0 %v54
  %253 = vmatprep.subr.mxu0 %v58
  %254 = vmatpush1.msra.mxu0 %v57
  %255 = vmatprep.subr.mxu0 %v61
  %256 = vmatpush1.msra.mxu0 %v60
  %257 = vmatprep.subr.mxu0 %v64
  %258 = vmatpush1.msra.mxu0 %v63
  %259 = vmatprep.subr.mxu0 %v67
  %260 = vmatpush1.msra.mxu0 %v66
  %261 = vmatprep.subr.mxu0 %v70
  %262 = vmatpush1.msra.mxu0 %v69
  %263 = vmatprep.subr.mxu0 %v73
  %264 = vmatpush1.msra.mxu0 %v72
  %265 = vmatprep.subr.mxu0 %v76
  %266 = vmatpush1.msra.mxu0 %v75
  %267 = vmatprep.subr.mxu0 %v79
  %268 = vmatpush1.msra.mxu0 %v78
  %269 = vmatprep.subr.mxu0 %v82
  %270 = vmatpush1.msra.mxu0 %v81
  %271 = vmatprep.subr.mxu0 %v85
  %272 = vmatpush1.msra.mxu0 %v84
  %273 = vmatprep.subr.mxu0 %v88
  %274 = vmatpush1.msra.mxu0 %v87
  %275 = vmatprep.subr.mxu0 %v91
  %276 = vmatpush1.msra.mxu0 %v90
  %277 = vmatprep.subr.mxu0 %v94
  %278 = vmatpush1.msra.mxu0 %v93
  %279 = vmatprep.subr.mxu0 %v97
  %280 = vmatpush1.msra.mxu0 %v96
  %281 = vmatprep.subr.mxu0 %v100
  %282 = vmatpush1.msra.mxu0 %v99
  %283 = vmatprep.subr.mxu0 %v103
  %284 = vmatpush1.msra.mxu0 %v102
  %285 = vmatprep.subr.mxu0 %v106
  %286 = vmatpush1.msra.mxu0 %v105
  %287 = vmatprep.subr.mxu0 %v109
  %288 = vmatpush1.msra.mxu0 %v108
  %289 = vmatprep.subr.mxu0 %v112
  %290 = vmatpush1.msra.mxu0 %v111
  %291 = vmatprep.mubr.f32.mxu0 %v15
  %292 = vmatmul.mubr.f32.gmra.mrb[0].mxu0 %v14
  %v293 = vpop.f32.mrb[0].mxu0
  %v294 = vadd.f32 %v215, %v293
  %v295 = vpop.f32.mrb[0].mxu0
  %v296 = vadd.f32 %v219, %v295
  %297 = vdwg.mxu0
  %298 = vmatprep.subr.mxu0 %v115
  %299 = vmatpush1.msra.mxu0 %v114
  %300 = vmatprep.subr.mxu0 %v118
  %301 = vmatpush1.msra.mxu0 %v117
  %302 = vmatprep.subr.mxu0 %v121
  %303 = vmatpush1.msra.mxu0 %v120
  %304 = vmatprep.subr.mxu0 %v124
  %305 = vmatpush1.msra.mxu0 %v123
  %306 = vmatprep.subr.mxu0 %v127
  %307 = vmatpush1.msra.mxu0 %v126
  %308 = vmatprep.subr.mxu0 %v130
  %309 = vmatpush1.msra.mxu0 %v129
  %310 = vmatprep.subr.mxu0 %v133
  %311 = vmatpush1.msra.mxu0 %v132
  %312 = vmatprep.subr.mxu0 %v136
  %313 = vmatpush1.msra.mxu0 %v135
  %314 = vmatprep.subr.mxu0 %v139
  %315 = vmatpush1.msra.mxu0 %v138
  %316 = vmatprep.subr.mxu0 %v142
  %317 = vmatpush1.msra.mxu0 %v141
  %318 = vmatprep.subr.mxu0 %v145
  %319 = vmatpush1.msra.mxu0 %v144
  %320 = vmatprep.subr.mxu0 %v148
  %321 = vmatpush1.msra.mxu0 %v147
  %322 = vmatprep.subr.mxu0 %v151
  %323 = vmatpush1.msra.mxu0 %v150
  %324 = vmatprep.subr.mxu0 %v154
  %325 = vmatpush1.msra.mxu0 %v153
  %326 = vmatprep.subr.mxu0 %v157
  %327 = vmatpush1.msra.mxu0 %v156
  %328 = vmatprep.subr.mxu0 %v160
  %329 = vmatpush1.msra.mxu0 %v159
  %330 = vmatprep.subr.mxu0 %v163
  %331 = vmatpush1.msra.mxu0 %v162
  %332 = vmatprep.subr.mxu0 %v166
  %333 = vmatpush1.msra.mxu0 %v165
  %334 = vmatprep.subr.mxu0 %v169
  %335 = vmatpush1.msra.mxu0 %v168
  %336 = vmatprep.subr.mxu0 %v172
  %337 = vmatpush1.msra.mxu0 %v171
  %338 = vmatprep.subr.mxu0 %v175
  %339 = vmatpush1.msra.mxu0 %v174
  %340 = vmatprep.subr.mxu0 %v178
  %341 = vmatpush1.msra.mxu0 %v177
  %342 = vmatprep.subr.mxu0 %v181
  %343 = vmatpush1.msra.mxu0 %v180
  %344 = vmatprep.subr.mxu0 %v184
  %345 = vmatpush1.msra.mxu0 %v183
  %346 = vmatprep.subr.mxu0 %v187
  %347 = vmatpush1.msra.mxu0 %v186
  %348 = vmatprep.subr.mxu0 %v190
  %349 = vmatpush1.msra.mxu0 %v189
  %350 = vmatprep.subr.mxu0 %v193
  %351 = vmatpush1.msra.mxu0 %v192
  %352 = vmatprep.subr.mxu0 %v196
  %353 = vmatpush1.msra.mxu0 %v195
  %354 = vmatprep.subr.mxu0 %v199
  %355 = vmatpush1.msra.mxu0 %v198
  %356 = vmatprep.subr.mxu0 %v202
  %357 = vmatpush1.msra.mxu0 %v201
  %358 = vmatprep.subr.mxu0 %v205
  %359 = vmatpush1.msra.mxu0 %v204
  %360 = vmatprep.subr.mxu0 %v208
  %361 = vmatpush1.msra.mxu0 %v207
  %362 = vmatprep.mubr.f32.mxu0 %v17
  %363 = vmatmul.mubr.f32.gmra.mrb[0].mxu0 %v16
  %v364 = vpop.f32.mrb[0].mxu0
  %v365 = vadd.f32 %v294, %v364
  %v366 = vpop.f32.mrb[0].mxu0
  %v367 = vadd.f32 %v296, %v366
  %368 = vdwg.mxu0
  %369 = vmatprep.subr.mxu0 0.0
  %370 = vmatpush1.msra.mxu0 %v20
  %371 = vmatprep.subr.mxu0 0.0
  %372 = vmatpush1.msra.mxu0 %v23
  %373 = vmatprep.subr.mxu0 0.0
  %374 = vmatpush1.msra.mxu0 %v26
  %375 = vmatprep.subr.mxu0 0.0
  %376 = vmatpush1.msra.mxu0 %v29
  %377 = vmatprep.subr.mxu0 0.0
  %378 = vmatpush1.msra.mxu0 %v32
  %379 = vmatprep.subr.mxu0 0.0
  %380 = vmatpush1.msra.mxu0 %v35
  %381 = vmatprep.subr.mxu0 0.0
  %382 = vmatpush1.msra.mxu0 %v38
  %383 = vmatprep.subr.mxu0 0.0
  %384 = vmatpush1.msra.mxu0 %v41
  %385 = vmatprep.subr.mxu0 0.0
  %386 = vmatpush1.msra.mxu0 %v44
  %387 = vmatprep.subr.mxu0 0.0
  %388 = vmatpush1.msra.mxu0 %v47
  %389 = vmatprep.subr.mxu0 0.0
  %390 = vmatpush1.msra.mxu0 %v50
  %391 = vmatprep.subr.mxu0 0.0
  %392 = vmatpush1.msra.mxu0 %v53
  %393 = vmatprep.subr.mxu0 0.0
  %394 = vmatpush1.msra.mxu0 %v56
  %395 = vmatprep.subr.mxu0 0.0
  %396 = vmatpush1.msra.mxu0 %v59
  %397 = vmatprep.subr.mxu0 0.0
  %398 = vmatpush1.msra.mxu0 %v62
  %399 = vmatprep.subr.mxu0 0.0
  %400 = vmatpush1.msra.mxu0 %v65
  %401 = vmatprep.subr.mxu0 0.0
  %402 = vmatpush1.msra.mxu0 %v68
  %403 = vmatprep.subr.mxu0 0.0
  %404 = vmatpush1.msra.mxu0 %v71
  %405 = vmatprep.subr.mxu0 0.0
  %406 = vmatpush1.msra.mxu0 %v74
  %407 = vmatprep.subr.mxu0 0.0
  %408 = vmatpush1.msra.mxu0 %v77
  %409 = vmatprep.subr.mxu0 0.0
  %410 = vmatpush1.msra.mxu0 %v80
  %411 = vmatprep.subr.mxu0 0.0
  %412 = vmatpush1.msra.mxu0 %v83
  %413 = vmatprep.subr.mxu0 0.0
  %414 = vmatpush1.msra.mxu0 %v86
  %415 = vmatprep.subr.mxu0 0.0
  %416 = vmatpush1.msra.mxu0 %v89
  %417 = vmatprep.subr.mxu0 0.0
  %418 = vmatpush1.msra.mxu0 %v92
  %419 = vmatprep.subr.mxu0 0.0
  %420 = vmatpush1.msra.mxu0 %v95
  %421 = vmatprep.subr.mxu0 0.0
  %422 = vmatpush1.msra.mxu0 %v98
  %423 = vmatprep.subr.mxu0 0.0
  %424 = vmatpush1.msra.mxu0 %v101
  %425 = vmatprep.subr.mxu0 0.0
  %426 = vmatpush1.msra.mxu0 %v104
  %427 = vmatprep.subr.mxu0 0.0
  %428 = vmatpush1.msra.mxu0 %v107
  %429 = vmatprep.subr.mxu0 0.0
  %430 = vmatpush1.msra.mxu0 %v110
  %431 = vmatprep.subr.mxu0 0.0
  %432 = vmatpush1.msra.mxu0 %v113
  %433 = vmatprep.mubr.f32.mxu0 %v15
  %434 = vmatmul.mubr.f32.gmra.mrb[0].mxu0 %v14
  %v435 = vpop.f32.mrb[0].mxu0
  %v436 = vadd.f32 %v223, %v435
  %v437 = vpop.f32.mrb[0].mxu0
  %438 = vdwg.mxu0
  %439 = vmatprep.subr.mxu0 0.0
  %440 = vmatpush1.msra.mxu0 %v116
  %441 = vmatprep.subr.mxu0 0.0
  %442 = vmatpush1.msra.mxu0 %v119
  %443 = vmatprep.subr.mxu0 0.0
  %444 = vmatpush1.msra.mxu0 %v122
  %445 = vmatprep.subr.mxu0 0.0
  %446 = vmatpush1.msra.mxu0 %v125
  %447 = vmatprep.subr.mxu0 0.0
  %448 = vmatpush1.msra.mxu0 %v128
  %449 = vmatprep.subr.mxu0 0.0
  %450 = vmatpush1.msra.mxu0 %v131
  %451 = vmatprep.subr.mxu0 0.0
  %452 = vmatpush1.msra.mxu0 %v134
  %453 = vmatprep.subr.mxu0 0.0
  %454 = vmatpush1.msra.mxu0 %v137
  %455 = vmatprep.subr.mxu0 0.0
  %456 = vmatpush1.msra.mxu0 %v140
  %457 = vmatprep.subr.mxu0 0.0
  %458 = vmatpush1.msra.mxu0 %v143
  %459 = vmatprep.subr.mxu0 0.0
  %460 = vmatpush1.msra.mxu0 %v146
  %461 = vmatprep.subr.mxu0 0.0
  %462 = vmatpush1.msra.mxu0 %v149
  %463 = vmatprep.subr.mxu0 0.0
  %464 = vmatpush1.msra.mxu0 %v152
  %465 = vmatprep.subr.mxu0 0.0
  %466 = vmatpush1.msra.mxu0 %v155
  %467 = vmatprep.subr.mxu0 0.0
  %468 = vmatpush1.msra.mxu0 %v158
  %469 = vmatprep.subr.mxu0 0.0
  %470 = vmatpush1.msra.mxu0 %v161
  %471 = vmatprep.subr.mxu0 0.0
  %472 = vmatpush1.msra.mxu0 %v164
  %473 = vmatprep.subr.mxu0 0.0
  %474 = vmatpush1.msra.mxu0 %v167
  %475 = vmatprep.subr.mxu0 0.0
  %476 = vmatpush1.msra.mxu0 %v170
  %477 = vmatprep.subr.mxu0 0.0
  %478 = vmatpush1.msra.mxu0 %v173
  %479 = vmatprep.subr.mxu0 0.0
  %480 = vmatpush1.msra.mxu0 %v176
  %481 = vmatprep.subr.mxu0 0.0
  %482 = vmatpush1.msra.mxu0 %v179
  %483 = vmatprep.subr.mxu0 0.0
  %484 = vmatpush1.msra.mxu0 %v182
  %485 = vmatprep.subr.mxu0 0.0
  %486 = vmatpush1.msra.mxu0 %v185
  %487 = vmatprep.subr.mxu0 0.0
  %488 = vmatpush1.msra.mxu0 %v188
  %489 = vmatprep.subr.mxu0 0.0
  %490 = vmatpush1.msra.mxu0 %v191
  %491 = vmatprep.subr.mxu0 0.0
  %492 = vmatpush1.msra.mxu0 %v194
  %493 = vmatprep.subr.mxu0 0.0
  %494 = vmatpush1.msra.mxu0 %v197
  %495 = vmatprep.subr.mxu0 0.0
  %496 = vmatpush1.msra.mxu0 %v200
  %497 = vmatprep.subr.mxu0 0.0
  %498 = vmatpush1.msra.mxu0 %v203
  %499 = vmatprep.subr.mxu0 0.0
  %500 = vmatpush1.msra.mxu0 %v206
  %501 = vmatprep.subr.mxu0 0.0
  %502 = vmatpush1.msra.mxu0 %v209
  %503 = vmatprep.mubr.f32.mxu0 %v17
  %504 = vmatmul.mubr.f32.gmra.mrb[0].mxu0 %v16
  %v505 = vpop.f32.mrb[0].mxu0
  %v506 = vadd.f32 %v436, %v505
  %v507 = vpop.f32.mrb[0].mxu0
  %508 = vdwg.mxu0
  %509 = vst [vmem:[%s3] sm:$0xff] %v365
  %510 = vst [vmem:[%s3 + $0x8] sm:$0xff] %v367
  %511 = vst [vmem:[%s3 + $0x10] sm:$0xff] %v506
  // Predicated region
  $region14: #{ann_linear_forward.1} parent=0 // pred_check
    _
  $region15: #{ann_linear_forward.1} parent=0 // pred_check_branch
    %513 = sbr.rel (0) target = $region17
  $region16: #{ann_linear_forward.1} parent=0 // pred_region
    _
  $region17: #{ann_linear_forward.1} parent=0 // pred_fallthru
    _
  // Predicated region
  $region18: #{ann_linear_forward.1} parent=0 // pred_check
    _
  $region19: #{ann_linear_forward.1} parent=0 // pred_check_branch
    %515 = sbr.rel (0) target = $region21
  $region20: #{ann_linear_forward.1} parent=0 // pred_region
    _
  $region21: #{ann_linear_forward.1} parent=0 // pred_fallthru
    _

</llo_original>
